<compile_context>
chip_gen: v5e
topology: v5e:2x2
jax: 0.10.0
libtpu: 0.0.40
codegen_flags: <defaults>
</compile_context>

<pallas_src>
import functools

import jax
import jax.numpy as jnp
import numpy as np
from jax.experimental import pallas as pl
from jax.experimental.pallas import tpu as pltpu


_LANE_CANDIDATES = (512, 256, 128)   # lane-dense widths (multiples of 128)
_MAX_ROW_TILE = 1024                 # sublane rows per block (2 MiB f32 @ lane=512)
_VMEM_LIMIT_BYTES = 32 * 1024 * 1024


def _sublane(dtype):
    itemsize = np.dtype(dtype).itemsize
    return {4: 8, 2: 16, 1: 32}.get(itemsize, 8)


def _pick_lane(n, dtype):
    """Pick a lane width that divides n exactly (no padding, no output slice).

    Prefer the largest candidate whose row count is a multiple of the sublane
    tile (unmasked sublane stores); otherwise the largest that divides n.
    Returns None if n is not a multiple of 128.
    """
    sub = _sublane(dtype)
    fallback = None
    for lane in _LANE_CANDIDATES:
        if n % lane:
            continue
        if fallback is None:
            fallback = lane
        if (n // lane) % sub == 0:
            return lane
    return fallback


def _droppath_kernel(keep_ref, x_ref, o_ref, *, scale):
    """One grid step = one (batch sample, spatial row-tile).

    keep_ref : SMEM scalar-prefetch ref, shape (B,), int32 0/1 keep mask.
    x_ref    : VMEM tile, shape (1, ROW_TILE, LANE).
    o_ref    : VMEM tile, shape (1, ROW_TILE, LANE).
    """
    b = pl.program_id(0)
    keep = keep_ref[b]

    @pl.when(keep == 0)
    def _():
        # Dropped sample: never read x_ref (its DMA is dedup'd away), write 0.
        o_ref[...] = jnp.zeros_like(o_ref)

    @pl.when(keep != 0)
    def _():
        # Kept sample: single VPU broadcast-multiply by compile-time 1/keep_prob.
        o_ref[...] = x_ref[...] * jnp.asarray(scale, dtype=o_ref.dtype)


def _drop_path_reference(x, keep, scale):
    """Pure-JAX DropPath given a precomputed (B,) keep mask (for fusion/tests)."""
    shape = (x.shape[0],) + (1,) * (x.ndim - 1)
    factor = keep.astype(x.dtype) * jnp.asarray(scale, dtype=x.dtype)
    return x * factor.reshape(shape)


def drop_path(x, *, drop_prob=0.0, scale_by_keep=True, training=True,
              key=None, use_pallas=True, max_row_tile=_MAX_ROW_TILE):
    """JAX/Pallas equivalent of DropPath.forward for an NC... (3D/4D/5D) tensor."""
    if drop_prob == 0.0 or not training:
        return x
    if key is None:
        key = jax.random.PRNGKey(0)

    keep_prob = 1.0 - drop_prob
    B = x.shape[0]

    # Per-sample Bernoulli keep mask, computed ONCE outside the kernel
    # (independent of the spatial tiling).
    keep = jax.random.bernoulli(key, p=keep_prob, shape=(B,)).astype(jnp.int32)
    scale = (1.0 / keep_prob) if (scale_by_keep and keep_prob > 0.0) else 1.0

    n = 1
    for d in x.shape[1:]:
        n *= int(d)
    lane = _pick_lane(n, x.dtype)

    if not use_pallas or lane is None:
        # n not a multiple of 128: a standalone kernel would need a pad +
        # slice round-trip (~3x HBM traffic).  Let XLA fuse the multiply
        # instead — the activation is streamed exactly once.
        return _drop_path_reference(x, keep, scale)

    orig_shape = x.shape
    rows = n // lane
    row_tile = rows if rows <= max_row_tile else max_row_tile
    num_row_tiles = pl.cdiv(rows, row_tile)
    itemsize = np.dtype(x.dtype).itemsize

    # Lane/sublane-dense layout, no padding: (B, rows, lane).
    x3 = x.reshape(B, rows, lane)

    kernel = functools.partial(_droppath_kernel, scale=scale)

    out = pl.pallas_call(
        kernel,
        out_shape=jax.ShapeDtypeStruct((B, rows, lane), x.dtype),
        grid_spec=pltpu.PrefetchScalarGridSpec(
            num_scalar_prefetch=1,
            grid=(B, num_row_tiles),
            in_specs=[
                # keep-aware dedup: a dropped sample maps every row-tile onto
                # input block 0, so the pipeliner skips re-fetching its input
                # (the keep==0 branch never reads x_ref).
                pl.BlockSpec((1, row_tile, lane),
                             lambda b, t, keep_ref: (b, t * keep_ref[b], 0)),
            ],
            out_specs=pl.BlockSpec((1, row_tile, lane),
                                   lambda b, t, keep_ref: (b, t, 0)),
        ),
        # Operand 0 is the prefetched keep mask; operand 1 (the activation)
        # aliases output 0 — no second full-size HBM allocation.
        input_output_aliases={1: 0},
        cost_estimate=pl.CostEstimate(
            flops=B * n,
            transcendentals=0,
            bytes_accessed=2 * B * n * itemsize,
        ),
        compiler_params=pltpu.CompilerParams(
            dimension_semantics=("parallel", "parallel"),
            vmem_limit_bytes=_VMEM_LIMIT_BYTES,
        ),
    )(keep, x3)

    return out.reshape(orig_shape)


if __name__ == "__main__":
    root_key = jax.random.PRNGKey(0)
    kx, kdp, kx2, kdp2, kx3, kdp3, kx4, kdp4, kx5, kdp5 = jax.random.split(root_key, 10)

    drop_prob = 0.2
    keep_prob = 1.0 - drop_prob

    def check(x, key, **kwargs):
        y = drop_path(x, drop_prob=drop_prob, scale_by_keep=True, training=True,
                      key=key, **kwargs)
        y = jax.block_until_ready(y)
        keep_exp = jax.random.bernoulli(key, p=keep_prob, shape=(x.shape[0],))
        y_ref = _drop_path_reference(x, keep_exp.astype(jnp.int32), 1.0 / keep_prob)
        np.testing.assert_allclose(
            np.asarray(jax.device_get(y), dtype=np.float32),
            np.asarray(jax.device_get(y_ref), dtype=np.float32),
            rtol=1e-6, atol=1e-6)
        return y

    # --- test 1: small 4D shape; lane auto-selects 128 (rows sublane-aligned)
    B, C, H, W = 2, 4, 16, 16
    x = jax.random.normal(kx, (B, C, H, W), dtype=jnp.float32)
    y = check(x, kdp)
    y_np, x_np = jax.device_get(y), jax.device_get(x)
    for b in range(B):
        dropped = np.allclose(y_np[b], 0.0)
        kept = np.allclose(y_np[b], x_np[b] / keep_prob, rtol=1e-5, atol=1e-5)
        assert dropped or kept, f"sample {b}: invalid DropPath output"

    # --- test 2: 5D activation consistent with UNext 3D blocks (lane=512) ----
    x2 = jax.random.normal(kx2, (2, 32, 8, 8, 8), dtype=jnp.float32)
    check(x2, kdp2)

    # --- test 3: multi-row-tile grid with a partial edge block ---------------
    x3 = jax.random.normal(kx3, (2, 32, 8, 8, 10), dtype=jnp.float32)  # rows=40
    check(x3, kdp3, max_row_tile=16)                                   # grid=(2,3)

    # --- test 4: bf16 (sublane=16 lane selection) -----------------------------
    x4 = jax.random.normal(kx4, (2, 32, 4, 8, 8), dtype=jnp.bfloat16)
    check(x4, kdp4)

    # --- test 5: non-128-aligned shape -> fused pure-JAX path -----------------
    x5 = jax.random.normal(kx5, (2, 5, 9, 11), dtype=jnp.float32)
    check(x5, kdp5)

    # --- test 6: eval / drop_prob=0 path is identity (PyTorch semantics) ------
    y_eval = drop_path(x, drop_prob=drop_prob, training=False)
    assert np.allclose(jax.device_get(y_eval), x_np)
    y_zero = drop_path(x, drop_prob=0.0, training=True)
    assert np.allclose(jax.device_get(y_zero), x_np)

    print("KERNEL_OK")
</pallas_src>

<mosaic_0001>
module attributes {stable_mosaic.version = 11 : i64} {
  func.func @_droppath_kernel(%arg0: i32, %arg1: i32, %arg2: memref<2xi32, #tpu.memory_space<smem>>, %arg3: memref<1x8x128xf32, #tpu.memory_space<vmem>>, %arg4: memref<1x8x128xf32, #tpu.memory_space<vmem>>) attributes {dimension_semantics = [#tpu.dimension_semantics<parallel>, #tpu.dimension_semantics<parallel>], iteration_bounds = array<i64: 2, 1>, scalar_prefetch = 1 : i64, scratch_operands = 0 : i64, tpu.core_type = #tpu.core_type<tc>, window_params = [{transform_indices = @transform_0, window_bounds = array<i64: 1, 8, 128>}, {transform_indices = @transform_1, window_bounds = array<i64: 1, 8, 128>}]} {
    %0 = arith.index_cast %arg0 : i32 to index
    %1 = memref.load %arg2[%0] : memref<2xi32, #tpu.memory_space<smem>>
    %c0_i32 = arith.constant 0 : i32
    %2 = arith.cmpi eq, %1, %c0_i32 : i32
    %3 = arith.extui %2 : i1 to i32
    %c0_i32_0 = arith.constant 0 : i32
    %4 = arith.cmpi ne, %3, %c0_i32_0 : i32
    scf.if %4 {
      %cst = arith.constant 0.000000e+00 : f32
      %8 = vector.broadcast %cst : f32 to vector<1x8x128xf32>
      %c0 = arith.constant 0 : index
      %c0_3 = arith.constant 0 : index
      %c0_4 = arith.constant 0 : index
      %9 = vector.load %arg4[%c0, %c0_3, %c0_4] : memref<1x8x128xf32, #tpu.memory_space<vmem>>, vector<1x8x128xf32>
      tpu.vector_store %arg4[%c0, %c0_3, %c0_4], %8 {strides = array<i32>} : memref<1x8x128xf32, #tpu.memory_space<vmem>>, vector<1x8x128xf32>,
    } else {
    }
    %c0_i32_1 = arith.constant 0 : i32
    %5 = arith.cmpi ne, %1, %c0_i32_1 : i32
    %6 = arith.extui %5 : i1 to i32
    %c0_i32_2 = arith.constant 0 : i32
    %7 = arith.cmpi ne, %6, %c0_i32_2 : i32
    scf.if %7 {
      %c0 = arith.constant 0 : index
      %c0_3 = arith.constant 0 : index
      %c0_4 = arith.constant 0 : index
      %8 = vector.load %arg3[%c0, %c0_3, %c0_4] : memref<1x8x128xf32, #tpu.memory_space<vmem>>, vector<1x8x128xf32>
      %cst = arith.constant 1.250000e+00 : f32
      %9 = vector.broadcast %cst : f32 to vector<1x8x128xf32>
      %10 = arith.mulf %8, %9 : vector<1x8x128xf32>
      %c0_5 = arith.constant 0 : index
      %c0_6 = arith.constant 0 : index
      %c0_7 = arith.constant 0 : index
      %11 = vector.load %arg4[%c0_5, %c0_6, %c0_7] : memref<1x8x128xf32, #tpu.memory_space<vmem>>, vector<1x8x128xf32>
      tpu.vector_store %arg4[%c0_5, %c0_6, %c0_7], %10 {strides = array<i32>} : memref<1x8x128xf32, #tpu.memory_space<vmem>>, vector<1x8x128xf32>,
    } else {
    }
    return
  }
  func.func @transform_0(%arg0: i32, %arg1: i32, %arg2: memref<2xi32, #tpu.memory_space<smem>>) -> (i32, i32, i32) {
    %0 = arith.index_cast %arg0 : i32 to index
    %1 = memref.load %arg2[%0] : memref<2xi32, #tpu.memory_space<smem>>
    %2 = arith.muli %arg1, %1 : i32
    %c0_i32 = arith.constant 0 : i32
    %c0_i32_0 = arith.constant 0 : i32
    return %arg0, %2, %c0_i32 : i32, i32, i32
  }
  func.func @transform_1(%arg0: i32, %arg1: i32, %arg2: memref<2xi32, #tpu.memory_space<smem>>) -> (i32, i32, i32) {
    %c0_i32 = arith.constant 0 : i32
    %c0_i32_0 = arith.constant 0 : i32
    return %arg0, %arg1, %c0_i32 : i32, i32, i32
  }
}

</mosaic_0001>

<llo_original>
// kernel: tpu_custom_call.1
$region0: #{tpu_custom_call.1}
  #allocation0 [shape = 'u32[]', space=smem, size = 0x4, offset = 0x4, fixed_abs, tag = 'smem constant byte address 0x4 - core index']
  #allocation1 [shape = 'u32[72,128]{1,0:T(1,128)}', space=vmem, size = 0x9000, scoped, tag = 'internal scratch']
  #allocation2 [shape = 's32[1]{0}', space=sflag, size = 0x4, scoped, tag = 'scoped memory for tpu_custom_call.1']
  #allocation3 [shape = 'u8[512]{0}', space=smem, size = 0x200, scoped, tag = 'prefetched SMEM operand 0']
  %s0 = inlined_call_operand.vmem [shape: s32[2], index: 0, kind: input, shape index: {}]
  %s1 = inlined_call_operand.hbm [shape: f32[2,8,128], index: 1, kind: input, shape index: {}, may-alias: {1,2}]
  %s2 = inlined_call_operand.hbm [shape: f32[2,8,128], index: 2, kind: output, shape index: {}, may-alias: {1,2}]
  %s3 = sld [smem:[#allocation0]]
  $region49: #{tpu_custom_call.1} parent=0
    _
  %s5 = ssub.s32 1, %s3
  %s6 = scalar_select 0, %s5, %s3
  %s8 = sshll.u32 %s0, 4
  %s9 = int_to_ptr.vmem [resolvable:$true] %s8
  %11 = dma.vmem_to_smem %s9, 16, [#allocation3], [#allocation2]
  %13 = dma.done [#allocation2], 16
  %14 = sfence
  $region1: #{tpu_custom_call.1} parent=0
    #allocation4 [shape = 'u8[8192]{0}', space=vmem, size = 0x2000, scoped, tag = 'input window, operand 1']
    #allocation5 [shape = 's32[2]{0}', space=sflag, size = 0x8, scoped, tag = 'scoped memory for tpu_custom_call.1']
    #allocation6 [shape = 's32[2]{0}', space=sflag, size = 0x8, scoped, tag = 'scoped memory for tpu_custom_call.1']
    #allocation7 [shape = 'u8[8192]{0}', space=vmem, size = 0x2000, scoped, tag = 'output window, operand 0']
    %15 = vsyncpa [#allocation5], 0
    %s16 = scalar_lea.sflag [#allocation5], 1
    %17 = vsyncpa %s16, 0
    %18 = vsyncpa [#allocation6], 0
    %s19 = scalar_lea.sflag [#allocation6], 1
    %20 = vsyncpa %s19, 0
    loop: start=0, step=1, limit=4
    $region2: #{tpu_custom_call.1} parent=1 // loop_pre_header
      _
    $region3: #{tpu_custom_call.1} parent=1 // loop_header
      %s22 = sphi 0, %s26
      %p23 = scmp.ge.s32.totalorder %s22, 4
      %s29 = sphi 0, %s41
      %s30 = sphi 0, %s37
      %s31 = sphi 0, %s29
      %s32 = sphi 0, %s30
      %s33 = sphi 0, %s31
      %s34 = sphi 0, %s32
      %s50 = sphi 0, %s52
      %s53 = sphi 0, %s50
      %s54 = sphi 0, %s53
      %s70 = sphi 0, %s54
      %s78 = sphi 0, %s80
      %s81 = sphi 0, %s78
      %s82 = sphi 0, %s81
      %s98 = sphi 0, %s82
    $region4: #{tpu_custom_call.1} parent=1 // loop_header_branch
      %25 = sbr.rel (%p23) target = $region8
    $region5: #{tpu_custom_call.1} parent=1 // loop_body
      %s27 = ssub.s32 %s22, 1
      %s28 = ssub.s32 %s22, 2
      %s35 = sadd.s32 1, %s30
      %p36 = scmp.ge.s32.totalorder %s35, 1
      %s37 = scalar_select %p36, 0, %s35
      %s38 = sadd.s32 1, %s29
      %s39 = scalar_select %p36, %s38, %s29
      %p40 = scmp.ge.s32.totalorder %s39, 2
      %s41 = scalar_select %p40, 0, %s39
      %s42 = sld [smem:[#allocation3 + %s29]]
      %s43 = smul.u32 %s30, %s42
      %s44 = sld [smem:[#allocation3 + %s41]]
      %s45 = smul.u32 %s37, %s44
      %s46 = ssub.s32 %s29, %s41
      %s47 = ssub.s32 %s43, %s45
      %s48 = sor.u32 %s46, %s47
      %p49 = scmp.eq.s32.totalorder %s48, 0
      %s51 = sadd.s32 %s50, 1
      %s52 = scalar_select %p49, %s50, %s51
      %p55 = pneg %p49
      %p56 = scmp.eq.s32.totalorder %s22, 1
      %p57 = por %p55, %p56
      %p58 = scmp.ne.s32.totalorder %s50, %s53
      %p59 = scmp.eq.s32.totalorder %s22, 0
      %p60 = por %p58, %p59
      %p61 = scmp.ne.s32.totalorder %s50, %s53
      %p62 = scmp.eq.s32.totalorder %s27, 1
      %p63 = por %p61, %p62
      %p64 = scmp.ne.s32.totalorder %s53, %s54
      %p65 = scmp.eq.s32.totalorder %s27, 0
      %p66 = por %p64, %p65
      %p67 = scmp.ne.s32.totalorder %s53, %s54
      %p68 = scmp.eq.s32.totalorder %s28, 1
      %p69 = por %p67, %p68
      %p71 = scmp.ne.s32.totalorder %s54, %s70
      %p72 = scmp.eq.s32.totalorder %s28, 0
      %p73 = por %p71, %p72
      %s74 = ssub.s32 %s29, %s41
      %s75 = ssub.s32 %s30, %s37
      %s76 = sor.u32 %s74, %s75
      %p77 = scmp.eq.s32.totalorder %s76, 0
      %s79 = sadd.s32 %s78, 1
      %s80 = scalar_select %p77, %s78, %s79
      %p83 = pneg %p77
      %p84 = scmp.eq.s32.totalorder %s22, 1
      %p85 = por %p83, %p84
      %p86 = scmp.ne.s32.totalorder %s78, %s81
      %p87 = scmp.eq.s32.totalorder %s22, 0
      %p88 = por %p86, %p87
      %p89 = scmp.ne.s32.totalorder %s78, %s81
      %p90 = scmp.eq.s32.totalorder %s27, 1
      %p91 = por %p89, %p90
      %p92 = scmp.ne.s32.totalorder %s81, %s82
      %p93 = scmp.eq.s32.totalorder %s27, 0
      %p94 = por %p92, %p93
      %p95 = scmp.ne.s32.totalorder %s81, %s82
      %p96 = scmp.eq.s32.totalorder %s28, 1
      %p97 = por %p95, %p96
      %p99 = scmp.ne.s32.totalorder %s82, %s98
      %p100 = scmp.eq.s32.totalorder %s28, 0
      %p101 = por %p99, %p100
      %p102 = scmp.le.s32.totalorder 1, %s22
      %p103 = scmp.lt.s32.totalorder %s22, 3
      %p104 = pnand %p102, %p103
      %p105 = pneg %p104
      // Predicated region
      $region9: #{tpu_custom_call.1} parent=5 // pred_check
        _
      $region10: #{tpu_custom_call.1} parent=5 // pred_check_branch
        %107 = sbr.rel (%p104) target = $region12
      $region11: #{tpu_custom_call.1} parent=5 // pred_region
        %s108 = ssub.s32 %s22, 1
      $region12: #{tpu_custom_call.1} parent=5 // pred_fallthru
        _
      %p109 = scmp.lt.s32.totalorder %s22, 2
      // Predicated region
      $region13: #{tpu_custom_call.1} parent=5 // pred_check
        %p110 = pneg %p109
      $region14: #{tpu_custom_call.1} parent=5 // pred_check_branch
        %112 = sbr.rel (%p110) target = $region16
      $region15: #{tpu_custom_call.1} parent=5 // pred_region
        // Predicated region
        $region17: #{tpu_custom_call.1} parent=15 // pred_check
          %p113 = pneg %p60
        $region18: #{tpu_custom_call.1} parent=15 // pred_check_branch
          %115 = sbr.rel (%p113) target = $region20
        $region19: #{tpu_custom_call.1} parent=15 // pred_region
          %s116 = sand.u32 %s50, 1
          %s117 = scalar_lea.sflag [#allocation5], %s116
          %s118 = sand.u32 %s50, 1
          %s119 = smul.addr %s118, 8
          %s120 = scalar_lea.vmem [#allocation4], %s119
          %s121 = sld [smem:[#allocation3 + %s29]]
          %s122 = smul.u32 %s30, %s121
          %124 = vsyncadd %s117, 0
          %s125 = sadd.s32 %s122, %s29
          %s126 = smul.addr %s125, 8
          %s127 = scalar_lea.hbm %s1, %s126
          %s129 = sshll.u32 %s127, 4
          %s130 = int_to_ptr.hbm [resolvable:$true] %s129
          %s131 = sshll.u32 %s120, 4
          %s132 = int_to_ptr.vmem [resolvable:$true] %s131
          %134 = dma.hbm_to_vmem [thread:$0]  %s130, 128, %s132, %s117
        $region20: #{tpu_custom_call.1} parent=15 // pred_fallthru
          _
      $region16: #{tpu_custom_call.1} parent=5 // pred_fallthru
        _
      %p135 = scmp.le.s32.totalorder 1, %s22
      %p136 = scmp.lt.s32.totalorder %s22, 3
      %p137 = pnand %p135, %p136
      %p138 = pneg %p137
      // Predicated region
      $region21: #{tpu_custom_call.1} parent=5 // pred_check
        _
      $region22: #{tpu_custom_call.1} parent=5 // pred_check_branch
        %140 = sbr.rel (%p137) target = $region24
      $region23: #{tpu_custom_call.1} parent=5 // pred_region
        %s141 = ssub.s32 %s22, 1
        %s142 = sand.u32 %s53, 1
        %s143 = scalar_lea.sflag [#allocation5], %s142
        %s144 = sand.u32 %s53, 1
        %s145 = smul.addr %s144, 8
        %s146 = scalar_lea.vmem [#allocation4], %s145
        // Predicated region
        $region25: #{tpu_custom_call.1} parent=23 // pred_check
          %p147 = pneg %p66
        $region26: #{tpu_custom_call.1} parent=23 // pred_check_branch
          %149 = sbr.rel (%p147) target = $region28
        $region27: #{tpu_custom_call.1} parent=23 // pred_region
          %151 = dma.done %s143, 128
        $region28: #{tpu_custom_call.1} parent=23 // pred_fallthru
          _
        %s152 = sand.u32 %s53, 1
        %s153 = scalar_lea.sflag [#allocation5], %s152
        %s154 = sand.u32 %s53, 1
        %s155 = smul.addr %s154, 8
        %s156 = scalar_lea.vmem [#allocation4], %s155
        %p157 = pneg %p66
        %p158 = pneg %p63
        %p159 = pneg %p94
        %p160 = pneg %p91
        %s161 = sand.u32 %s81, 1
        %s162 = scalar_lea.sflag [#allocation6], %s161
        %s163 = sand.u32 %s81, 1
        %s164 = smul.addr %s163, 8
        %s165 = scalar_lea.vmem [#allocation7], %s164
        %s166 = sld [smem:[#allocation3 + %s31]]
        %s167 = smul.u32 %s32, %s166
        %s168 = sld [smem:[#allocation3 + %s31]]
        %p169 = scmp.eq.s32.totalorder %s168, 0
        // Predicated region
        $region29: #{tpu_custom_call.1} parent=23 // pred_check
          %p170 = pneg %p169
        $region30: #{tpu_custom_call.1} parent=23 // pred_check_branch
          %172 = sbr.rel (%p170) target = $region32
        $region31: #{tpu_custom_call.1} parent=23 // pred_region
          %173 = vst [vmem:[%s165] sm:$0xff] 0.0
        $region32: #{tpu_custom_call.1} parent=23 // pred_fallthru
          _
        %p174 = scmp.ne.s32.totalorder %s168, 0
        // Predicated region
        $region33: #{tpu_custom_call.1} parent=23 // pred_check
          %p175 = pneg %p174
        $region34: #{tpu_custom_call.1} parent=23 // pred_check_branch
          %177 = sbr.rel (%p175) target = $region36
        $region35: #{tpu_custom_call.1} parent=23 // pred_region
          %v178 = vld [vmem:[%s146] sm:$0xff]
          %v179 = vmul.f32 %v178, 1.25
          %180 = vst [vmem:[%s165] sm:$0xff] %v179
        $region36: #{tpu_custom_call.1} parent=23 // pred_fallthru
          _
        %s181 = sand.u32 %s81, 1
        %s182 = scalar_lea.sflag [#allocation6], %s181
        %s183 = sand.u32 %s81, 1
        %s184 = smul.addr %s183, 8
        %s185 = scalar_lea.vmem [#allocation7], %s184
        // Predicated region
        $region37: #{tpu_custom_call.1} parent=23 // pred_check
          %p186 = pneg %p91
        $region38: #{tpu_custom_call.1} parent=23 // pred_check_branch
          %188 = sbr.rel (%p186) target = $region40
        $region39: #{tpu_custom_call.1} parent=23 // pred_region
          %190 = vsyncadd %s182, 0
          %s191 = sadd.s32 %s32, %s31
          %s192 = smul.addr %s191, 8
          %s193 = scalar_lea.hbm %s2, %s192
          %s195 = sshll.u32 %s185, 4
          %s196 = int_to_ptr.vmem [resolvable:$true] %s195
          %s197 = sshll.u32 %s193, 4
          %s198 = int_to_ptr.hbm [resolvable:$true] %s197
          %200 = dma.vmem_to_hbm [thread:$0]  %s196, 128, %s198, %s182
        $region40: #{tpu_custom_call.1} parent=23 // pred_fallthru
          _
      $region24: #{tpu_custom_call.1} parent=5 // pred_fallthru
        _
      %p201 = scmp.le.s32.totalorder 2, %s22
      // Predicated region
      $region41: #{tpu_custom_call.1} parent=5 // pred_check
        %p202 = pneg %p201
      $region42: #{tpu_custom_call.1} parent=5 // pred_check_branch
        %204 = sbr.rel (%p202) target = $region44
      $region43: #{tpu_custom_call.1} parent=5 // pred_region
        %s205 = ssub.s32 %s22, 2
        // Predicated region
        $region45: #{tpu_custom_call.1} parent=43 // pred_check
          %p206 = pneg %p97
        $region46: #{tpu_custom_call.1} parent=43 // pred_check_branch
          %208 = sbr.rel (%p206) target = $region48
        $region47: #{tpu_custom_call.1} parent=43 // pred_region
          %s209 = sand.u32 %s82, 1
          %s210 = scalar_lea.sflag [#allocation6], %s209
          %s211 = sand.u32 %s82, 1
          %s212 = smul.addr %s211, 8
          %s213 = scalar_lea.vmem [#allocation7], %s212
          %215 = dma.done %s210, 128
        $region48: #{tpu_custom_call.1} parent=43 // pred_fallthru
          _
      $region44: #{tpu_custom_call.1} parent=5 // pred_fallthru
        _
    $region6: #{tpu_custom_call.1} parent=1 // loop_footer
      %s26 = sadd.s32 1, %s22
    $region7: #{tpu_custom_call.1} parent=1 // loop_footer_branch
      %21 = sbr.rel target = $region3
    $region8: #{tpu_custom_call.1} parent=1 // loop_exit
      _
    %216 = vsyncpa [#allocation5], 1
    %s217 = scalar_lea.sflag [#allocation5], 1
    %218 = vsyncpa %s217, 1
    %219 = vsyncpa [#allocation6], 1
    %s220 = scalar_lea.sflag [#allocation6], 1
    %221 = vsyncpa %s220, 1

</llo_original>
